<compile_context>
chip_gen: v7x
topology: tpu7x:2x2x1
jax: 0.10.0
libtpu: 0.0.40
codegen_flags: <defaults>
</compile_context>

<pallas_src>
import functools

import jax
import jax.numpy as jnp
from jax.experimental import pallas as pl
from jax.experimental.pallas import tpu as pltpu


# ----------------------------------------------------------------------------
# Kernels
# ----------------------------------------------------------------------------
def _heads_epilogue(d, dp, z, h_bf, w_heads_ref, b_heads_ref, mu_ref, sigma_ref):
    """Fused m|g|s projection + gating + softplus; two lane-dense stores."""
    heads = (jnp.dot(h_bf, w_heads_ref[...], preferred_element_type=jnp.float32)
             + b_heads_ref[...])                         # [TB, 3*dp] = m | g | s
    m = heads[:, 0:dp]
    g = jax.nn.sigmoid(heads[:, dp:2 * dp])
    s = heads[:, 2 * dp:3 * dp]

    if dp == d:
        z_wide = z
    else:
        # Widen z with zeros to the padded head width.  Padded g columns are
        # sigmoid(0)=0.5 and padded m columns are 0, so padded mu columns are
        # exactly 0; they are sliced away in the wrapper.
        z_wide = jnp.concatenate(
            [z, jnp.zeros((z.shape[0], dp - d), z.dtype)], axis=-1)

    mu = g * m + (1.0 - g) * z_wide                      # num_stable=True path
    sigma = jnp.logaddexp(s, 0.0)                        # numerically stable softplus
    mu_ref[...] = mu.astype(mu_ref.dtype)
    sigma_ref[...] = sigma.astype(sigma_ref.dtype)


def _refinement_kernel_ctx(d, dp, z_ref, x_ref, wh_z_ref, wh_x_ref, bh_ref,
                           w_heads_ref, b_heads_ref, mu_ref, sigma_ref):
    z = z_ref[...]
    # h = relu(z @ Wh_z + x @ Wh_x + bh); bf16 MXU operands, f32 accumulation.
    h_lin = (jnp.dot(z.astype(wh_z_ref.dtype), wh_z_ref[...],
                     preferred_element_type=jnp.float32)
             + jnp.dot(x_ref[...].astype(wh_x_ref.dtype), wh_x_ref[...],
                       preferred_element_type=jnp.float32)
             + bh_ref[...])
    h = jnp.maximum(h_lin, 0.0)
    _heads_epilogue(d, dp, z, h.astype(w_heads_ref.dtype),
                    w_heads_ref, b_heads_ref, mu_ref, sigma_ref)


def _refinement_kernel_noctx(d, dp, z_ref, wh_z_ref, bh_ref,
                             w_heads_ref, b_heads_ref, mu_ref, sigma_ref):
    z = z_ref[...]
    h_lin = (jnp.dot(z.astype(wh_z_ref.dtype), wh_z_ref[...],
                     preferred_element_type=jnp.float32)
             + bh_ref[...])
    h = jnp.maximum(h_lin, 0.0)
    _heads_epilogue(d, dp, z, h.astype(w_heads_ref.dtype),
                    w_heads_ref, b_heads_ref, mu_ref, sigma_ref)


# ----------------------------------------------------------------------------
# Wrapper
# ----------------------------------------------------------------------------
def _round_up(n, m):
    return ((n + m - 1) // m) * m


def _vmem_capacity_bytes():
    try:
        return int(pltpu.get_tpu_info().vmem_capacity_bytes)
    except Exception:
        return 64 * 1024 * 1024          # conservative: v7x per-TC VMEM


def refinement_operator_forward(z, packed, x=None, *, batch_tile=512):
    """Pallas-backed forward of RefinementOperatorModule.

    z: [B, D] float32; x: optional [B, C] float32 (context).
    packed: dict from pack_params() (bf16, lane-padded fused weights).
    Returns (mu [B, D], sigma [B, D]) float32.
    """
    B, D = z.shape
    Hp = packed["bh"].shape[-1]                  # padded hidden width (128-mult)
    Dp = packed["b_heads"].shape[-1] // 3        # padded per-head width (128-mult)
    has_ctx = x is not None
    C = x.shape[-1] if has_ctx else 0

    # ---- batch tile: multiple of 8, sized to a VMEM budget ------------------
    batch_tile = max(8, (int(batch_tile) // 8) * 8)
    cap = _vmem_capacity_bytes()
    budget = int(cap * 0.6)                      # headroom for compiler scratch
    # Per-row bytes: double-buffered f32 in/out tiles + f32 intermediates
    # (h [Hp], heads [3*Dp], mu/sigma/z_wide [~3*Dp]).
    per_row = 2 * 4 * (D + C + 2 * Dp) + 4 * (Hp + 3 * Dp + 3 * Dp)
    # Residents: bf16 matmul weights + f32 biases, double-buffered (default).
    weight_bytes = 2 * (2 * Hp * (D + C + 3 * Dp) + 4 * Hp + 4 * 3 * Dp)
    tb_fit = max(8, ((budget - weight_bytes) // max(per_row, 1)) // 8 * 8)
    TB = min(batch_tile, _round_up(B, 8), tb_fit)

    grid = (pl.cdiv(B, TB),)                     # trailing partial block is masked

    est = weight_bytes + TB * per_row + (1 << 20)
    vmem_limit = int(min(0.9 * cap, max(2 * est, 32 * 1024 * 1024)))

    def batch_spec(width):
        return pl.BlockSpec((TB, width), lambda i: (i, 0))

    def resident_spec(shape):
        # Same block every grid step -> stays VMEM-resident (no re-DMA).
        return pl.BlockSpec(shape, lambda i: (0, 0))

    out_shape = (jax.ShapeDtypeStruct((B, Dp), z.dtype),
                 jax.ShapeDtypeStruct((B, Dp), z.dtype))
    out_specs = (batch_spec(Dp), batch_spec(Dp))

    if not has_ctx:
        kernel = functools.partial(_refinement_kernel_noctx, D, Dp)
        in_specs = [
            batch_spec(D),                        # z
            resident_spec((D, Hp)),               # Wh_z  (bf16)
            resident_spec((1, Hp)),               # bh    (f32)
            resident_spec((Hp, 3 * Dp)),          # W_heads = [Wm|Wg|Ws] (bf16)
            resident_spec((1, 3 * Dp)),           # b_heads (f32)
        ]
        args = (z, packed["wh_z"], packed["bh"],
                packed["w_heads"], packed["b_heads"])
    else:
        kernel = functools.partial(_refinement_kernel_ctx, D, Dp)
        in_specs = [
            batch_spec(D),                        # z
            batch_spec(C),                        # x
            resident_spec((D, Hp)),               # Wh_z
            resident_spec((C, Hp)),               # Wh_x
            resident_spec((1, Hp)),               # bh
            resident_spec((Hp, 3 * Dp)),          # W_heads
            resident_spec((1, 3 * Dp)),           # b_heads
        ]
        args = (z, x, packed["wh_z"], packed["wh_x"], packed["bh"],
                packed["w_heads"], packed["b_heads"])

    mu_p, sigma_p = pl.pallas_call(
        kernel,
        out_shape=out_shape,
        grid_spec=pltpu.PrefetchScalarGridSpec(
            num_scalar_prefetch=0,
            grid=grid,
            in_specs=in_specs,
            out_specs=out_specs,
        ),
        compiler_params=pltpu.CompilerParams(
            dimension_semantics=("parallel",),    # shards batch across TCs on v7x
            vmem_limit_bytes=vmem_limit,
        ),
    )(*args)

    if Dp == D:
        return mu_p, sigma_p
    return mu_p[:, :D], sigma_p[:, :D]


# ----------------------------------------------------------------------------
# Parameters (match nn.Linear layer shapes, then packed for the kernel)
# ----------------------------------------------------------------------------
def init_params(key, input_dimension, hidden_dimension, context_dimension=0):
    """Deterministic synthetic parameters (shapes match the nn.Linear layers).

    nn.Linear(in, out) stores weight [out, in]; here we keep the transpose
    [in, out] and biases as [1, out] for lane-friendly broadcasting.
    """
    in_h = input_dimension + context_dimension
    ks = jax.random.split(key, 8)

    def lin(kw, kb, fan_in, fan_out):
        bound = 1.0 / jnp.sqrt(fan_in)
        w = jax.random.uniform(kw, (fan_in, fan_out), jnp.float32, -bound, bound)
        b = jax.random.uniform(kb, (1, fan_out), jnp.float32, -bound, bound)
        return w, b

    wh, bh = lin(ks[0], ks[1], in_h, hidden_dimension)
    ws, bs = lin(ks[2], ks[3], hidden_dimension, input_dimension)
    wm, bm = lin(ks[4], ks[5], hidden_dimension, input_dimension)
    wg, bg = lin(ks[6], ks[7], hidden_dimension, input_dimension)
    return {"wh": wh, "bh": bh, "ws": ws, "bs": bs,
            "wm": wm, "bm": bm, "wg": wg, "bg": bg}


def pack_params(params, input_dimension, context_dimension=0,
                *, weight_dtype=jnp.bfloat16):
    """Pack raw per-layer params into the fused, lane-padded, bf16 layout.

    - Hidden width H and the per-head output width D are zero-padded to
      multiples of 128 so head slices are lane-tile aligned and the kernel
      outputs are lane-dense.
    - Matmul weights are cast to bf16 (MXU native); biases stay f32 (added
      after the f32 accumulation).
    """
    D = input_dimension
    C = context_dimension
    H = params["bh"].shape[-1]
    Dp = _round_up(D, 128)
    Hp = _round_up(H, 128)

    def pad_to(w, rows, cols):
        return jnp.pad(w, ((0, rows - w.shape[0]), (0, cols - w.shape[1])))

    wh = params["wh"]                                    # [(D+C), H]
    packed = {
        "wh_z": pad_to(wh[:D, :], D, Hp).astype(weight_dtype),
        "bh": pad_to(params["bh"], 1, Hp),
        # head order m | g | s  (kernel slices at multiples of Dp in this order)
        "w_heads": jnp.concatenate(
            [pad_to(params["wm"], Hp, Dp),
             pad_to(params["wg"], Hp, Dp),
             pad_to(params["ws"], Hp, Dp)], axis=1).astype(weight_dtype),
        "b_heads": jnp.concatenate(
            [pad_to(params["bm"], 1, Dp),
             pad_to(params["bg"], 1, Dp),
             pad_to(params["bs"], 1, Dp)], axis=1),
    }
    if C > 0:
        packed["wh_x"] = pad_to(wh[D:, :], C, Hp).astype(weight_dtype)
    return packed


def _reference_forward(z, params, x=None):
    """Pure-JAX f32 reference (unfused), mirrors the PyTorch module."""
    inp = z if x is None else jnp.concatenate([z, x], axis=1)
    h = jnp.maximum(inp @ params["wh"] + params["bh"], 0.0)
    m = h @ params["wm"] + params["bm"]
    g = jax.nn.sigmoid(h @ params["wg"] + params["bg"])
    mu = g * m + (1.0 - g) * z
    sigma = jax.nn.softplus(h @ params["ws"] + params["bs"])
    return mu, sigma


# ----------------------------------------------------------------------------
# Self-test
# ----------------------------------------------------------------------------
if __name__ == "__main__":
    batch = 8
    input_dimension = 32
    hidden_dimension = 16
    context_dimension = 8

    key = jax.random.PRNGKey(0)
    kz, kx, kp1, kp2, kz3, kx3 = jax.random.split(key, 6)
    z = jax.random.normal(kz, (batch, input_dimension), jnp.float32)
    x = jax.random.normal(kx, (batch, context_dimension), jnp.float32)

    # bf16 MXU operands vs f32 reference -> relaxed tolerance (accuracy
    # trade-off from the optimization, not a bug).
    tol = dict(atol=5e-2, rtol=5e-2)

    # --- with context ---
    params_ctx = init_params(kp1, input_dimension, hidden_dimension, context_dimension)
    packed_ctx = pack_params(params_ctx, input_dimension, context_dimension)
    mu, sigma = refinement_operator_forward(z, packed_ctx, x)
    jax.block_until_ready((mu, sigma))
    mu_ref, sigma_ref = _reference_forward(z, params_ctx, x)
    assert mu.shape == (batch, input_dimension)
    assert sigma.shape == (batch, input_dimension)
    assert jnp.allclose(mu, mu_ref, **tol)
    assert jnp.allclose(sigma, sigma_ref, **tol)

    # --- without context, batch not a multiple of 8 (partial trailing block) ---
    params_noctx = init_params(kp2, input_dimension, hidden_dimension, 0)
    packed_noctx = pack_params(params_noctx, input_dimension, 0)
    z2 = z[:5]
    mu2, sigma2 = refinement_operator_forward(z2, packed_noctx, None)
    jax.block_until_ready((mu2, sigma2))
    mu2_ref, sigma2_ref = _reference_forward(z2, params_noctx, None)
    assert mu2.shape == (5, input_dimension)
    assert sigma2.shape == (5, input_dimension)
    assert jnp.allclose(mu2, mu2_ref, **tol)
    assert jnp.allclose(sigma2, sigma2_ref, **tol)

    # --- multi-step grid with a partial trailing block (no batch pad) ---
    z3 = jax.random.normal(kz3, (200, input_dimension), jnp.float32)
    x3 = jax.random.normal(kx3, (200, context_dimension), jnp.float32)
    mu3, sigma3 = refinement_operator_forward(z3, packed_ctx, x3, batch_tile=64)
    jax.block_until_ready((mu3, sigma3))
    mu3_ref, sigma3_ref = _reference_forward(z3, params_ctx, x3)
    assert jnp.allclose(mu3, mu3_ref, **tol)
    assert jnp.allclose(sigma3, sigma3_ref, **tol)

    print("KERNEL_OK")
</pallas_src>

<mosaic_0001>
module attributes {stable_mosaic.version = 11 : i64} {
  func.func @_refinement_kernel_ctx(%arg0: i32, %arg1: memref<8x32xf32, #tpu.memory_space<vmem>>, %arg2: memref<8x8xf32, #tpu.memory_space<vmem>>, %arg3: memref<32x128xbf16, #tpu.memory_space<vmem>>, %arg4: memref<8x128xbf16, #tpu.memory_space<vmem>>, %arg5: memref<1x128xf32, #tpu.memory_space<vmem>>, %arg6: memref<128x384xbf16, #tpu.memory_space<vmem>>, %arg7: memref<1x384xf32, #tpu.memory_space<vmem>>, %arg8: memref<8x128xf32, #tpu.memory_space<vmem>>, %arg9: memref<8x128xf32, #tpu.memory_space<vmem>>) attributes {dimension_semantics = [#tpu.dimension_semantics<parallel>], iteration_bounds = array<i64: 1>, scalar_prefetch = 0 : i64, scratch_operands = 0 : i64, tpu.core_type = #tpu.core_type<tc>, window_params = [{transform_indices = @transform_0, window_bounds = array<i64: 8, 32>}, {transform_indices = @transform_1, window_bounds = array<i64: 8, 8>}, {pipeline_mode = #tpu.pipeline_mode<synchronous>, transform_indices = @transform_2, window_bounds = array<i64: 32, 128>}, {pipeline_mode = #tpu.pipeline_mode<synchronous>, transform_indices = @transform_3, window_bounds = array<i64: 8, 128>}, {pipeline_mode = #tpu.pipeline_mode<synchronous>, transform_indices = @transform_4, window_bounds = array<i64: 1, 128>}, {pipeline_mode = #tpu.pipeline_mode<synchronous>, transform_indices = @transform_5, window_bounds = array<i64: 128, 384>}, {pipeline_mode = #tpu.pipeline_mode<synchronous>, transform_indices = @transform_6, window_bounds = array<i64: 1, 384>}, {transform_indices = @transform_7, window_bounds = array<i64: 8, 128>}, {transform_indices = @transform_8, window_bounds = array<i64: 8, 128>}]} {
    %c0 = arith.constant 0 : index
    %c0_0 = arith.constant 0 : index
    %0 = vector.load %arg1[%c0, %c0_0] : memref<8x32xf32, #tpu.memory_space<vmem>>, vector<8x32xf32>
    %1 = arith.truncf %0 : vector<8x32xf32> to vector<8x32xbf16>
    %c0_1 = arith.constant 0 : index
    %c0_2 = arith.constant 0 : index
    %2 = vector.load %arg3[%c0_1, %c0_2] : memref<32x128xbf16, #tpu.memory_space<vmem>>, vector<32x128xbf16>
    %cst = arith.constant dense<0.000000e+00> : vector<8x128xf32>
    %3 = tpu.matmul %1, %2, %cst {dimension_numbers = #tpu.dot_dimension_numbers<[1], [0], [0], [1], [0, 0, 1, 1], [], []>} : vector<8x32xbf16>, vector<32x128xbf16>, vector<8x128xf32> -> vector<8x128xf32>
    %c0_3 = arith.constant 0 : index
    %c0_4 = arith.constant 0 : index
    %4 = vector.load %arg2[%c0_3, %c0_4] : memref<8x8xf32, #tpu.memory_space<vmem>>, vector<8x8xf32>
    %5 = arith.truncf %4 : vector<8x8xf32> to vector<8x8xbf16>
    %c0_5 = arith.constant 0 : index
    %c0_6 = arith.constant 0 : index
    %6 = vector.load %arg4[%c0_5, %c0_6] : memref<8x128xbf16, #tpu.memory_space<vmem>>, vector<8x128xbf16>
    %cst_7 = arith.constant dense<0.000000e+00> : vector<8x128xf32>
    %7 = tpu.matmul %5, %6, %cst_7 {dimension_numbers = #tpu.dot_dimension_numbers<[1], [0], [0], [1], [0, 0, 1, 1], [], []>} : vector<8x8xbf16>, vector<8x128xbf16>, vector<8x128xf32> -> vector<8x128xf32>
    %8 = arith.addf %3, %7 : vector<8x128xf32>
    %c0_8 = arith.constant 0 : index
    %c0_9 = arith.constant 0 : index
    %9 = vector.load %arg5[%c0_8, %c0_9] : memref<1x128xf32, #tpu.memory_space<vmem>>, vector<1x128xf32>
    %10 = vector.broadcast %9 : vector<1x128xf32> to vector<8x128xf32>
    %11 = arith.addf %8, %10 : vector<8x128xf32>
    %cst_10 = arith.constant 0.000000e+00 : f32
    %12 = vector.broadcast %cst_10 : f32 to vector<8x128xf32>
    %13 = arith.maximumf %11, %12 : vector<8x128xf32>
    %14 = arith.truncf %13 : vector<8x128xf32> to vector<8x128xbf16>
    %c0_11 = arith.constant 0 : index
    %c0_12 = arith.constant 0 : index
    %15 = vector.load %arg6[%c0_11, %c0_12] : memref<128x384xbf16, #tpu.memory_space<vmem>>, vector<128x384xbf16>
    %cst_13 = arith.constant dense<0.000000e+00> : vector<8x384xf32>
    %16 = tpu.matmul %14, %15, %cst_13 {dimension_numbers = #tpu.dot_dimension_numbers<[1], [0], [0], [1], [0, 0, 1, 1], [], []>} : vector<8x128xbf16>, vector<128x384xbf16>, vector<8x384xf32> -> vector<8x384xf32>
    %c0_14 = arith.constant 0 : index
    %c0_15 = arith.constant 0 : index
    %17 = vector.load %arg7[%c0_14, %c0_15] : memref<1x384xf32, #tpu.memory_space<vmem>>, vector<1x384xf32>
    %18 = vector.broadcast %17 : vector<1x384xf32> to vector<8x384xf32>
    %19 = arith.addf %16, %18 : vector<8x384xf32>
    %20 = vector.extract_strided_slice %19 {offsets = [0, 0], sizes = [8, 128], strides = [1, 1]} : vector<8x384xf32> to vector<8x128xf32>
    %21 = vector.extract_strided_slice %19 {offsets = [0, 128], sizes = [8, 128], strides = [1, 1]} : vector<8x384xf32> to vector<8x128xf32>
    %22 = arith.negf %21 : vector<8x128xf32>
    %23 = math.exp %22 : vector<8x128xf32>
    %cst_16 = arith.constant 1.000000e+00 : f32
    %24 = vector.broadcast %cst_16 : f32 to vector<8x128xf32>
    %25 = arith.addf %24, %23 : vector<8x128xf32>
    %26 = arith.divf %24, %25 : vector<8x128xf32>
    %27 = vector.extract_strided_slice %19 {offsets = [0, 256], sizes = [8, 128], strides = [1, 1]} : vector<8x384xf32> to vector<8x128xf32>
    %cst_17 = arith.constant 0.000000e+00 : f32
    %28 = vector.broadcast %cst_17 : f32 to vector<8x96xf32>
    %29 = tpu.concatenate %0, %28 in 1 : vector<8x32xf32>, vector<8x96xf32> -> vector<8x128xf32>
    %30 = arith.mulf %26, %20 : vector<8x128xf32>
    %cst_18 = arith.constant 1.000000e+00 : f32
    %31 = vector.broadcast %cst_18 : f32 to vector<8x128xf32>
    %32 = arith.subf %31, %26 : vector<8x128xf32>
    %33 = arith.mulf %32, %29 : vector<8x128xf32>
    %34 = arith.addf %30, %33 : vector<8x128xf32>
    %cst_19 = arith.constant 0.000000e+00 : f32
    %35 = vector.broadcast %cst_19 : f32 to vector<8x128xf32>
    %36 = arith.maximumf %27, %35 : vector<8x128xf32>
    %37 = vector.broadcast %cst_19 : f32 to vector<8x128xf32>
    %38 = arith.subf %27, %37 : vector<8x128xf32>
    %39 = arith.cmpf one, %38, %38 : vector<8x128xf32>
    %40 = vector.broadcast %cst_19 : f32 to vector<8x128xf32>
    %41 = arith.addf %27, %40 : vector<8x128xf32>
    %42 = math.absf %38 : vector<8x128xf32>
    %cst_20 = arith.constant 0.000000e+00 : f32
    %43 = vector.broadcast %cst_20 : f32 to vector<8x128xf32>
    %44 = arith.subf %43, %42 : vector<8x128xf32>
    %45 = math.exp %44 : vector<8x128xf32>
    %46 = math.log1p %45 : vector<8x128xf32>
    %47 = arith.addf %36, %46 : vector<8x128xf32>
    %48 = arith.select %39, %41, %47 : vector<8x128xi1>, vector<8x128xf32>
    %c0_21 = arith.constant 0 : index
    %c0_22 = arith.constant 0 : index
    %49 = vector.load %arg8[%c0_21, %c0_22] : memref<8x128xf32, #tpu.memory_space<vmem>>, vector<8x128xf32>
    tpu.vector_store %arg8[%c0_21, %c0_22], %34 {strides = array<i32>} : memref<8x128xf32, #tpu.memory_space<vmem>>, vector<8x128xf32>,
    %c0_23 = arith.constant 0 : index
    %c0_24 = arith.constant 0 : index
    %50 = vector.load %arg9[%c0_23, %c0_24] : memref<8x128xf32, #tpu.memory_space<vmem>>, vector<8x128xf32>
    tpu.vector_store %arg9[%c0_23, %c0_24], %48 {strides = array<i32>} : memref<8x128xf32, #tpu.memory_space<vmem>>, vector<8x128xf32>,
    return
  }
  func.func @transform_0(%arg0: i32) -> (i32, i32) {
    %c0_i32 = arith.constant 0 : i32
    %c0_i32_0 = arith.constant 0 : i32
    return %arg0, %c0_i32 : i32, i32
  }
  func.func @transform_1(%arg0: i32) -> (i32, i32) {
    %c0_i32 = arith.constant 0 : i32
    %c0_i32_0 = arith.constant 0 : i32
    return %arg0, %c0_i32 : i32, i32
  }
  func.func @transform_2(%arg0: i32) -> (i32, i32) {
    %c0_i32 = arith.constant 0 : i32
    %c0_i32_0 = arith.constant 0 : i32
    %c0_i32_1 = arith.constant 0 : i32
    return %c0_i32, %c0_i32_0 : i32, i32
  }
  func.func @transform_3(%arg0: i32) -> (i32, i32) {
    %c0_i32 = arith.constant 0 : i32
    %c0_i32_0 = arith.constant 0 : i32
    %c0_i32_1 = arith.constant 0 : i32
    return %c0_i32, %c0_i32_0 : i32, i32
  }
  func.func @transform_4(%arg0: i32) -> (i32, i32) {
    %c0_i32 = arith.constant 0 : i32
    %c0_i32_0 = arith.constant 0 : i32
    %c0_i32_1 = arith.constant 0 : i32
    return %c0_i32, %c0_i32_0 : i32, i32
  }
  func.func @transform_5(%arg0: i32) -> (i32, i32) {
    %c0_i32 = arith.constant 0 : i32
    %c0_i32_0 = arith.constant 0 : i32
    %c0_i32_1 = arith.constant 0 : i32
    return %c0_i32, %c0_i32_0 : i32, i32
  }
  func.func @transform_6(%arg0: i32) -> (i32, i32) {
    %c0_i32 = arith.constant 0 : i32
    %c0_i32_0 = arith.constant 0 : i32
    %c0_i32_1 = arith.constant 0 : i32
    return %c0_i32, %c0_i32_0 : i32, i32
  }
  func.func @transform_7(%arg0: i32) -> (i32, i32) {
    %c0_i32 = arith.constant 0 : i32
    %c0_i32_0 = arith.constant 0 : i32
    return %arg0, %c0_i32 : i32, i32
  }
  func.func @transform_8(%arg0: i32) -> (i32, i32) {
    %c0_i32 = arith.constant 0 : i32
    %c0_i32_0 = arith.constant 0 : i32
    return %arg0, %c0_i32 : i32, i32
  }
}

</mosaic_0001>

<llo_original>
// kernel: tpu_custom_call.1
$region0: #{tpu_custom_call.1}
  #allocation0 [shape = 'u32[]', space=smem, size = 0x4, offset = 0x4, fixed_abs, tag = 'smem constant byte address 0x4 - core index']
  #allocation1 [shape = 'u32[144,128]{1,0:T(1,128)}', space=vmem, size = 0x12000, scoped, tag = 'internal scratch']
  %s0 = inlined_call_operand.hbm [shape: f32[8,32], index: 0, kind: input, shape index: {}]
  %s1 = inlined_call_operand.hbm [shape: f32[8,8], index: 1, kind: input, shape index: {}]
  %s2 = inlined_call_operand.hbm [shape: bf16[32,128], index: 2, kind: input, shape index: {}]
  %s3 = inlined_call_operand.vmem [shape: bf16[8,128], index: 3, kind: input, shape index: {}]
  %s4 = inlined_call_operand.vmem [shape: f32[1,128], index: 4, kind: input, shape index: {}]
  %s5 = inlined_call_operand.hbm [shape: bf16[128,384], index: 5, kind: input, shape index: {}]
  %s6 = inlined_call_operand.vmem [shape: f32[1,384], index: 6, kind: input, shape index: {}]
  %s7 = inlined_call_operand.hbm [shape: f32[8,128], index: 7, kind: output, shape index: {0}]
  %s8 = inlined_call_operand.hbm [shape: f32[8,128], index: 8, kind: output, shape index: {1}]
  %9 = xla_tuple %s7, %s8
  %s10 = sld [smem:[#allocation0]]
  $region62: #{tpu_custom_call.1} parent=0
    _
  %s12 = ssub.s32 1, %s10
  %s13 = scalar_select 0, %s12, %s10
  $region1: #{tpu_custom_call.1} parent=0
    #allocation2 [shape = 'u8[4096]{0}', space=vmem, size = 0x1000, scoped, tag = 'input window, operand 0, single buffered']
    #allocation3 [shape = 's32[1]{0}', space=sflag, size = 0x4, scoped, tag = 'scoped memory for tpu_custom_call.1']
    #allocation4 [shape = 's32[1]{0}', space=sflag, size = 0x4, scoped, tag = 'scoped memory for tpu_custom_call.1']
    #allocation5 [shape = 'u8[4096]{0}', space=vmem, size = 0x1000, scoped, tag = 'input window, operand 1, single buffered']
    #allocation6 [shape = 's32[1]{0}', space=sflag, size = 0x4, scoped, tag = 'scoped memory for tpu_custom_call.1']
    #allocation7 [shape = 'u8[8192]{0}', space=vmem, size = 0x2000, scoped, tag = 'input window, operand 2, single buffered']
    #allocation8 [shape = 'u8[98304]{0}', space=vmem, size = 0x18000, scoped, tag = 'input window, operand 5, single buffered']
    #allocation9 [shape = 's32[1]{0}', space=sflag, size = 0x4, scoped, tag = 'scoped memory for tpu_custom_call.1']
    #allocation10 [shape = 'u8[4096]{0}', space=vmem, size = 0x1000, scoped, tag = 'output window, operand 0, single buffered']
    #allocation11 [shape = 'u8[4096]{0}', space=vmem, size = 0x1000, scoped, tag = 'output window, operand 1, single buffered']
    #allocation12 [shape = 's32[1]{0}', space=sflag, size = 0x4, scoped, tag = 'scoped memory for tpu_custom_call.1']
    %14 = vsyncpa [#allocation3], 0
    %15 = vsyncpa [#allocation6], 0
    %16 = vsyncpa [#allocation9], 0
    %17 = vsyncpa [#allocation4], 0
    %18 = vsyncpa [#allocation12], 0
    // Predicated region
    $region2: #{tpu_custom_call.1} parent=1 // pred_check
      _
    $region3: #{tpu_custom_call.1} parent=1 // pred_check_branch
      %20 = sbr.rel (0) target = $region5
    $region4: #{tpu_custom_call.1} parent=1 // pred_region
      %s22 = ssub.s32 128, 128
      %23 = vsyncadd [#allocation3], %s22
      %s25 = sshll.u32 [#allocation2], 4
      %s26 = int_to_ptr.vmem [resolvable:$true] %s25
      %28 = dma.hbm_to_vmem [thread:$0]  %s0, 128, %s26, [#allocation3]
    $region5: #{tpu_custom_call.1} parent=1 // pred_fallthru
      _
    // Predicated region
    $region6: #{tpu_custom_call.1} parent=1 // pred_check
      _
    $region7: #{tpu_custom_call.1} parent=1 // pred_check_branch
      %30 = sbr.rel (0) target = $region9
    $region8: #{tpu_custom_call.1} parent=1 // pred_region
      %s32 = ssub.s32 128, 128
      %33 = vsyncadd [#allocation6], %s32
      %s35 = sshll.u32 [#allocation5], 4
      %s36 = int_to_ptr.vmem [resolvable:$true] %s35
      %38 = dma.hbm_to_vmem [thread:$0]  %s1, 128, %s36, [#allocation6]
    $region9: #{tpu_custom_call.1} parent=1 // pred_fallthru
      _
    // Predicated region
    $region10: #{tpu_custom_call.1} parent=1 // pred_check
      _
    $region11: #{tpu_custom_call.1} parent=1 // pred_check_branch
      %40 = sbr.rel (0) target = $region13
    $region12: #{tpu_custom_call.1} parent=1 // pred_region
      %s42 = ssub.s32 256, 256
      %43 = vsyncadd [#allocation6], %s42
      %s44 = sshll.u32 [#allocation7], 4
      %s45 = int_to_ptr.vmem [resolvable:$true] %s44
      %50 = dma.hbm_to_vmem [thread:$0]  %s2, 256, %s45, [#allocation6], 64, 64, 4
    $region13: #{tpu_custom_call.1} parent=1 // pred_fallthru
      _
    // Predicated region
    $region14: #{tpu_custom_call.1} parent=1 // pred_check
      _
    $region15: #{tpu_custom_call.1} parent=1 // pred_check_branch
      %52 = sbr.rel (0) target = $region17
    $region16: #{tpu_custom_call.1} parent=1 // pred_region
      _
    $region17: #{tpu_custom_call.1} parent=1 // pred_fallthru
      _
    // Predicated region
    $region18: #{tpu_custom_call.1} parent=1 // pred_check
      _
    $region19: #{tpu_custom_call.1} parent=1 // pred_check_branch
      %54 = sbr.rel (0) target = $region21
    $region20: #{tpu_custom_call.1} parent=1 // pred_region
      _
    $region21: #{tpu_custom_call.1} parent=1 // pred_fallthru
      _
    // Predicated region
    $region22: #{tpu_custom_call.1} parent=1 // pred_check
      _
    $region23: #{tpu_custom_call.1} parent=1 // pred_check_branch
      %56 = sbr.rel (0) target = $region25
    $region24: #{tpu_custom_call.1} parent=1 // pred_region
      %s58 = ssub.s32 3072, 3072
      %59 = vsyncadd [#allocation9], %s58
      %s60 = sshll.u32 [#allocation8], 4
      %s61 = int_to_ptr.vmem [resolvable:$true] %s60
      %66 = dma.hbm_to_vmem [thread:$0]  %s5, 3072, %s61, [#allocation9], 192, 192, 12
    $region25: #{tpu_custom_call.1} parent=1 // pred_fallthru
      _
    // Predicated region
    $region26: #{tpu_custom_call.1} parent=1 // pred_check
      _
    $region27: #{tpu_custom_call.1} parent=1 // pred_check_branch
      %68 = sbr.rel (0) target = $region29
    $region28: #{tpu_custom_call.1} parent=1 // pred_region
      _
    $region29: #{tpu_custom_call.1} parent=1 // pred_fallthru
      _
    // Predicated region
    $region30: #{tpu_custom_call.1} parent=1 // pred_check
      _
    $region31: #{tpu_custom_call.1} parent=1 // pred_check_branch
      %70 = sbr.rel (0) target = $region33
    $region32: #{tpu_custom_call.1} parent=1 // pred_region
      %71 = dma.done [#allocation3], 128
    $region33: #{tpu_custom_call.1} parent=1 // pred_fallthru
      _
    // Predicated region
    $region34: #{tpu_custom_call.1} parent=1 // pred_check
      _
    $region35: #{tpu_custom_call.1} parent=1 // pred_check_branch
      %73 = sbr.rel (0) target = $region37
    $region36: #{tpu_custom_call.1} parent=1 // pred_region
      %74 = dma.done [#allocation6], 128
    $region37: #{tpu_custom_call.1} parent=1 // pred_fallthru
      _
    // Predicated region
    $region38: #{tpu_custom_call.1} parent=1 // pred_check
      _
    $region39: #{tpu_custom_call.1} parent=1 // pred_check_branch
      %76 = sbr.rel (0) target = $region41
    $region40: #{tpu_custom_call.1} parent=1 // pred_region
      %77 = dma.done [#allocation6], 256
    $region41: #{tpu_custom_call.1} parent=1 // pred_fallthru
      _
    // Predicated region
    $region42: #{tpu_custom_call.1} parent=1 // pred_check
      _
    $region43: #{tpu_custom_call.1} parent=1 // pred_check_branch
      %79 = sbr.rel (0) target = $region45
    $region44: #{tpu_custom_call.1} parent=1 // pred_region
      %80 = dma.done [#allocation9], 3072
    $region45: #{tpu_custom_call.1} parent=1 // pred_fallthru
      _
    %v82 = vld [vmem:[#allocation2] sm:$0xff]
    %v83 = vpack.c.bf16 %v82, %v82
    %v84 = vld [vmem:[#allocation7] sm:$0xf]
    %v85 = vld [vmem:[#allocation7 + $0x4] sm:$0xf]
    %v86 = vld [vmem:[#allocation7 + $0x8] sm:$0xf]
    %v87 = vld [vmem:[#allocation7 + $0xc] sm:$0xf]
    %v88 = vld [vmem:[#allocation5] sm:$0xff]
    %v89 = vpack.c.bf16 %v88, %v88
    %v90 = vld [vmem:[%s3] sm:$0xf]
    %vm91 = vcmask 64512
    %v93 = vsel %vm91, %v89, 0
    %vm95 = vcmask 1043456
    %v97 = vsel %vm95, %v90, 0
    %99 = vmatprep.subr.bf16.mxu0 0
    %100 = vmatpush1.bf16.msra.mxu0 %v97
    %101 = vmatprep.subr.bf16.mxu0 0
    %102 = vmatpush1.bf16.msra.mxu0 0
    %103 = vmatprep.subr.bf16.mxu0 0
    %104 = vmatpush1.bf16.msra.mxu0 0
    %105 = vmatprep.subr.bf16.mxu0 0
    %106 = vmatpush1.bf16.msra.mxu0 0
    %107 = vmatprep.subr.bf16.mxu0 0
    %108 = vmatpush1.bf16.msra.mxu0 0
    %109 = vmatprep.subr.bf16.mxu0 0
    %110 = vmatpush1.bf16.msra.mxu0 0
    %111 = vmatprep.subr.bf16.mxu0 0
    %112 = vmatpush1.bf16.msra.mxu0 0
    %113 = vmatprep.subr.bf16.mxu0 0
    %114 = vmatpush1.bf16.msra.mxu0 0
    %115 = vmatprep.subr.bf16.mxu0 0
    %116 = vmatpush1.bf16.msra.mxu0 0
    %117 = vmatprep.subr.bf16.mxu0 0
    %118 = vmatpush1.bf16.msra.mxu0 0
    %119 = vmatprep.subr.bf16.mxu0 0
    %120 = vmatpush1.bf16.msra.mxu0 0
    %121 = vmatprep.subr.bf16.mxu0 0
    %122 = vmatpush1.bf16.msra.mxu0 0
    %123 = vmatprep.subr.bf16.mxu0 0
    %124 = vmatpush1.bf16.msra.mxu0 0
    %125 = vmatprep.subr.bf16.mxu0 0
    %126 = vmatpush1.bf16.msra.mxu0 0
    %127 = vmatprep.subr.bf16.mxu0 0
    %128 = vmatpush1.bf16.msra.mxu0 0
    %129 = vmatprep.subr.bf16.mxu0 0
    %130 = vmatpush1.bf16.msra.mxu0 0
    %131 = vmatprep.mubr.bf16.mxu0 0
    %132 = vmatmul.mubr.bf16.gmra.mrb[0].mxu0 %v93
    %v133 = vpop.f32.mrb[0].mxu0
    %v134 = vadd.f32 0.0, %v133
    %v135 = vpop.f32.mrb[0].mxu0
    %v136 = vpop.f32.mrb[0].mxu0
    %v137 = vpop.f32.mrb[0].mxu0
    %138 = vdwg.mxu0
    %v143 = vunpack.c.l.b16 %v84
    %v144 = vunpack.c.l.b16 %v85
    %v145 = vunpack.c.l.b16 %v86
    %v146 = vunpack.c.l.b16 %v87
    %v147 = vpack.c.b16 %v144, %v143
    %v148 = vpack.c.b16 %v146, %v145
    %vm151 = vcmask 261120
    %v153 = vsel %vm151, %v83, 0
    %155 = vmatprep.subr.bf16.mxu0 0
    %156 = vmatpush1.bf16.msra.mxu0 %v147
    %157 = vmatprep.subr.bf16.mxu0 0
    %158 = vmatpush1.bf16.msra.mxu0 %v148
    %159 = vmatprep.subr.bf16.mxu0 0
    %160 = vmatpush1.bf16.msra.mxu0 0
    %161 = vmatprep.subr.bf16.mxu0 0
    %162 = vmatpush1.bf16.msra.mxu0 0
    %163 = vmatprep.subr.bf16.mxu0 0
    %164 = vmatpush1.bf16.msra.mxu0 0
    %165 = vmatprep.subr.bf16.mxu0 0
    %166 = vmatpush1.bf16.msra.mxu0 0
    %167 = vmatprep.subr.bf16.mxu0 0
    %168 = vmatpush1.bf16.msra.mxu0 0
    %169 = vmatprep.subr.bf16.mxu0 0
    %170 = vmatpush1.bf16.msra.mxu0 0
    %171 = vmatprep.subr.bf16.mxu0 0
    %172 = vmatpush1.bf16.msra.mxu0 0
    %173 = vmatprep.subr.bf16.mxu0 0
    %174 = vmatpush1.bf16.msra.mxu0 0
    %175 = vmatprep.subr.bf16.mxu0 0
    %176 = vmatpush1.bf16.msra.mxu0 0
    %177 = vmatprep.subr.bf16.mxu0 0
    %178 = vmatpush1.bf16.msra.mxu0 0
    %179 = vmatprep.subr.bf16.mxu0 0
    %180 = vmatpush1.bf16.msra.mxu0 0
    %181 = vmatprep.subr.bf16.mxu0 0
    %182 = vmatpush1.bf16.msra.mxu0 0
    %183 = vmatprep.subr.bf16.mxu0 0
    %184 = vmatpush1.bf16.msra.mxu0 0
    %185 = vmatprep.subr.bf16.mxu0 0
    %186 = vmatpush1.bf16.msra.mxu0 0
    %187 = vmatprep.mubr.bf16.mxu0 0
    %188 = vmatmul.mubr.bf16.gmra.mrb[0].mxu0 %v153
    %v189 = vpop.f32.mrb[0].mxu0
    %v190 = vadd.f32 %v134, %v189
    %v191 = vpop.f32.mrb[0].mxu0
    %v192 = vpop.f32.mrb[0].mxu0
    %v193 = vpop.f32.mrb[0].mxu0
    %194 = vdwg.mxu0
    %v195 = vld [vmem:[%s4] sm:$0x1]
    %v197 = vlaneseq
    %v198 = vshrl.u32 %v197, 7
    %v199 = vsub.s32 0, %v198
    %v200 = vrot.slane %v195, %v199
    %v202 = vadd.f32 %v190, %v200
    %v203 = vmax.f32 %v202, 0.0
    %v204 = vpack.c.bf16 %v203, %v203
    %v205 = vld [vmem:[#allocation8] sm:$0xff]
    %v206 = vld [vmem:[#allocation8 + $0x8] sm:$0xf]
    %v207 = vld [vmem:[#allocation8 + $0xc] sm:$0xff]
    %v208 = vld [vmem:[#allocation8 + $0x14] sm:$0xf]
    %v209 = vld [vmem:[#allocation8 + $0x18] sm:$0xff]
    %v210 = vld [vmem:[#allocation8 + $0x20] sm:$0xf]
    %v211 = vld [vmem:[#allocation8 + $0x24] sm:$0xff]
    %v212 = vld [vmem:[#allocation8 + $0x2c] sm:$0xf]
    %v213 = vld [vmem:[#allocation8 + $0x30] sm:$0xff]
    %v214 = vld [vmem:[#allocation8 + $0x38] sm:$0xf]
    %v215 = vld [vmem:[#allocation8 + $0x3c] sm:$0xff]
    %v216 = vld [vmem:[#allocation8 + $0x44] sm:$0xf]
    %v217 = vld [vmem:[#allocation8 + $0x48] sm:$0xff]
    %v218 = vld [vmem:[#allocation8 + $0x50] sm:$0xf]
    %v219 = vld [vmem:[#allocation8 + $0x54] sm:$0xff]
    %v220 = vld [vmem:[#allocation8 + $0x5c] sm:$0xf]
    %v221 = vld [vmem:[#allocation8 + $0x60] sm:$0xff]
    %v222 = vld [vmem:[#allocation8 + $0x68] sm:$0xf]
    %v223 = vld [vmem:[#allocation8 + $0x6c] sm:$0xff]
    %v224 = vld [vmem:[#allocation8 + $0x74] sm:$0xf]
    %v225 = vld [vmem:[#allocation8 + $0x78] sm:$0xff]
    %v226 = vld [vmem:[#allocation8 + $0x80] sm:$0xf]
    %v227 = vld [vmem:[#allocation8 + $0x84] sm:$0xff]
    %v228 = vld [vmem:[#allocation8 + $0x8c] sm:$0xf]
    %v229 = vld [vmem:[#allocation8 + $0x90] sm:$0xff]
    %v230 = vld [vmem:[#allocation8 + $0x98] sm:$0xf]
    %v231 = vld [vmem:[#allocation8 + $0x9c] sm:$0xff]
    %v232 = vld [vmem:[#allocation8 + $0xa4] sm:$0xf]
    %v233 = vld [vmem:[#allocation8 + $0xa8] sm:$0xff]
    %v234 = vld [vmem:[#allocation8 + $0xb0] sm:$0xf]
    %v235 = vld [vmem:[#allocation8 + $0xb4] sm:$0xff]
    %v236 = vld [vmem:[#allocation8 + $0xbc] sm:$0xf]
    %v237 = vld [vmem:[%s6] sm:$0x7]
    %v239 = vlaneseq
    %v240 = vshrl.u32 %v239, 7
    %v241 = vsub.s32 0, %v240
    %v242 = vrot.slane %v237, %v241
    %v243 = vlaneseq
    %v244 = vshrl.u32 %v243, 7
    %v245 = vsub.s32 1, %v244
    %v246 = vrot.slane %v237, %v245
    %v247 = vlaneseq
    %v248 = vshrl.u32 %v247, 7
    %v249 = vsub.s32 2, %v248
    %v250 = vrot.slane %v237, %v249
    %v286 = vunpack.c.l.b16 %v205
    %v287 = vunpack.c.h.b16 %v205
    %v288 = vunpack.c.l.b16 %v206
    %v289 = vunpack.c.l.b16 %v207
    %v290 = vunpack.c.h.b16 %v207
    %v291 = vunpack.c.l.b16 %v208
    %v292 = vunpack.c.l.b16 %v209
    %v293 = vunpack.c.h.b16 %v209
    %v294 = vunpack.c.l.b16 %v210
    %v295 = vunpack.c.l.b16 %v211
    %v296 = vunpack.c.h.b16 %v211
    %v297 = vunpack.c.l.b16 %v212
    %v298 = vunpack.c.l.b16 %v213
    %v299 = vunpack.c.h.b16 %v213
    %v300 = vunpack.c.l.b16 %v214
    %v301 = vunpack.c.l.b16 %v215
    %v302 = vunpack.c.h.b16 %v215
    %v303 = vunpack.c.l.b16 %v216
    %v304 = vunpack.c.l.b16 %v217
    %v305 = vunpack.c.h.b16 %v217
    %v306 = vunpack.c.l.b16 %v218
    %v307 = vunpack.c.l.b16 %v219
    %v308 = vunpack.c.h.b16 %v219
    %v309 = vunpack.c.l.b16 %v220
    %v310 = vunpack.c.l.b16 %v221
    %v311 = vunpack.c.h.b16 %v221
    %v312 = vunpack.c.l.b16 %v222
    %v313 = vunpack.c.l.b16 %v223
    %v314 = vunpack.c.h.b16 %v223
    %v315 = vunpack.c.l.b16 %v224
    %v316 = vunpack.c.l.b16 %v225
    %v317 = vunpack.c.h.b16 %v225
    %v318 = vunpack.c.l.b16 %v226
    %v319 = vunpack.c.l.b16 %v227
    %v320 = vunpack.c.h.b16 %v227
    %v321 = vunpack.c.l.b16 %v228
    %v322 = vunpack.c.l.b16 %v229
    %v323 = vunpack.c.h.b16 %v229
    %v324 = vunpack.c.l.b16 %v230
    %v325 = vunpack.c.l.b16 %v231
    %v326 = vunpack.c.h.b16 %v231
    %v327 = vunpack.c.l.b16 %v232
    %v328 = vunpack.c.l.b16 %v233
    %v329 = vunpack.c.h.b16 %v233
    %v330 = vunpack.c.l.b16 %v234
    %v331 = vunpack.c.l.b16 %v235
    %v332 = vunpack.c.h.b16 %v235
    %v333 = vunpack.c.l.b16 %v236
    %v334 = vpack.c.b16 %v289, %v286
    %v335 = vpack.c.b16 %v290, %v287
    %v336 = vpack.c.b16 %v291, %v288
    %v337 = vpack.c.b16 %v295, %v292
    %v338 = vpack.c.b16 %v296, %v293
    %v339 = vpack.c.b16 %v297, %v294
    %v340 = vpack.c.b16 %v301, %v298
    %v341 = vpack.c.b16 %v302, %v299
    %v342 = vpack.c.b16 %v303, %v300
    %v343 = vpack.c.b16 %v307, %v304
    %v344 = vpack.c.b16 %v308, %v305
    %v345 = vpack.c.b16 %v309, %v306
    %v346 = vpack.c.b16 %v313, %v310
    %v347 = vpack.c.b16 %v314, %v311
    %v348 = vpack.c.b16 %v315, %v312
    %v349 = vpack.c.b16 %v319, %v316
    %v350 = vpack.c.b16 %v320, %v317
    %v351 = vpack.c.b16 %v321, %v318
    %v352 = vpack.c.b16 %v325, %v322
    %v353 = vpack.c.b16 %v326, %v323
    %v354 = vpack.c.b16 %v327, %v324
    %v355 = vpack.c.b16 %v331, %v328
    %v356 = vpack.c.b16 %v332, %v329
    %v357 = vpack.c.b16 %v333, %v330
    %382 = vmatprep.subr.bf16.mxu0 %v335
    %383 = vmatpush1.bf16.msra.mxu0 %v334
    %384 = vmatprep.subr.bf16.mxu0 %v338
    %385 = vmatpush1.bf16.msra.mxu0 %v337
    %386 = vmatprep.subr.bf16.mxu0 %v341
    %387 = vmatpush1.bf16.msra.mxu0 %v340
    %388 = vmatprep.subr.bf16.mxu0 %v344
    %389 = vmatpush1.bf16.msra.mxu0 %v343
    %390 = vmatprep.subr.bf16.mxu0 %v347
    %391 = vmatpush1.bf16.msra.mxu0 %v346
    %392 = vmatprep.subr.bf16.mxu0 %v350
    %393 = vmatpush1.bf16.msra.mxu0 %v349
    %394 = vmatprep.subr.bf16.mxu0 %v353
    %395 = vmatpush1.bf16.msra.mxu0 %v352
    %396 = vmatprep.subr.bf16.mxu0 %v356
    %397 = vmatpush1.bf16.msra.mxu0 %v355
    %398 = vmatprep.subr.bf16.mxu0 0
    %399 = vmatpush1.bf16.msra.mxu0 0
    %400 = vmatprep.subr.bf16.mxu0 0
    %401 = vmatpush1.bf16.msra.mxu0 0
    %402 = vmatprep.subr.bf16.mxu0 0
    %403 = vmatpush1.bf16.msra.mxu0 0
    %404 = vmatprep.subr.bf16.mxu0 0
    %405 = vmatpush1.bf16.msra.mxu0 0
    %406 = vmatprep.subr.bf16.mxu0 0
    %407 = vmatpush1.bf16.msra.mxu0 0
    %408 = vmatprep.subr.bf16.mxu0 0
    %409 = vmatpush1.bf16.msra.mxu0 0
    %410 = vmatprep.subr.bf16.mxu0 0
    %411 = vmatpush1.bf16.msra.mxu0 0
    %412 = vmatprep.subr.bf16.mxu0 0
    %413 = vmatpush1.bf16.msra.mxu0 0
    %414 = vmatprep.mubr.bf16.mxu0 0
    %415 = vmatmul.mubr.bf16.gmra.mrb[0].mxu0 %v204
    %v416 = vpop.f32.mrb[0].mxu0
    %v417 = vadd.f32 %v242, %v416
    %v418 = vpop.f32.mrb[0].mxu0
    %v419 = vadd.f32 %v246, %v418
    %v420 = vpop.f32.mrb[0].mxu0
    %v421 = vpop.f32.mrb[0].mxu0
    %422 = vdwg.mxu0
    %423 = vmatprep.subr.bf16.mxu0 0
    %424 = vmatpush1.bf16.msra.mxu0 %v336
    %425 = vmatprep.subr.bf16.mxu0 0
    %426 = vmatpush1.bf16.msra.mxu0 %v339
    %427 = vmatprep.subr.bf16.mxu0 0
    %428 = vmatpush1.bf16.msra.mxu0 %v342
    %429 = vmatprep.subr.bf16.mxu0 0
    %430 = vmatpush1.bf16.msra.mxu0 %v345
    %431 = vmatprep.subr.bf16.mxu0 0
    %432 = vmatpush1.bf16.msra.mxu0 %v348
    %433 = vmatprep.subr.bf16.mxu0 0
    %434 = vmatpush1.bf16.msra.mxu0 %v351
    %435 = vmatprep.subr.bf16.mxu0 0
    %436 = vmatpush1.bf16.msra.mxu0 %v354
    %437 = vmatprep.subr.bf16.mxu0 0
    %438 = vmatpush1.bf16.msra.mxu0 %v357
    %439 = vmatprep.subr.bf16.mxu0 0
    %440 = vmatpush1.bf16.msra.mxu0 0
    %441 = vmatprep.subr.bf16.mxu0 0
    %442 = vmatpush1.bf16.msra.mxu0 0
    %443 = vmatprep.subr.bf16.mxu0 0
    %444 = vmatpush1.bf16.msra.mxu0 0
    %445 = vmatprep.subr.bf16.mxu0 0
    %446 = vmatpush1.bf16.msra.mxu0 0
    %447 = vmatprep.subr.bf16.mxu0 0
    %448 = vmatpush1.bf16.msra.mxu0 0
    %449 = vmatprep.subr.bf16.mxu0 0
    %450 = vmatpush1.bf16.msra.mxu0 0
    %451 = vmatprep.subr.bf16.mxu0 0
    %452 = vmatpush1.bf16.msra.mxu0 0
    %453 = vmatprep.subr.bf16.mxu0 0
    %454 = vmatpush1.bf16.msra.mxu0 0
    %455 = vmatprep.mubr.bf16.mxu0 0
    %456 = vmatmul.mubr.bf16.gmra.mrb[0].mxu0 %v204
    %v457 = vpop.f32.mrb[0].mxu0
    %v458 = vadd.f32 %v250, %v457
    %v459 = vpop.f32.mrb[0].mxu0
    %v460 = vpop.f32.mrb[0].mxu0
    %v461 = vpop.f32.mrb[0].mxu0
    %462 = vdwg.mxu0
    %v463 = vxor.u32 %v419, 2147483648
    %v464 = vmul.f32 %v463, 1.442695
    %v465 = vpow.pop %v464
    %v466 = vadd.f32 %v465, 1.0
    %v467 = vrcp.pop %v466
    %v468 = vmul.f32 1.0, %v467
    %v469 = vsel %vm151, %v82, 0.0
    %v470 = vmul.f32 %v468, %v417
    %v471 = vsub.f32 1.0, %v468
    %v472 = vmul.f32 %v471, %v469
    %v473 = vadd.f32 %v470, %v472
    %v474 = vmax.f32 %v458, 0.0
    %vm475 = vcmp.ne.f32.partialorder %v458, %v458
    %v476 = vadd.f32 %v458, 0.0
    %v477 = vand.u32 2147483647, %v458
    %v478 = vsub.f32 0.0, %v477
    %v479 = vmul.f32 %v478, 1.442695
    %v480 = vpow.pop %v479
    %v481 = vadd.f32 %v480, 1.0
    %v482 = vlog2.pop %v481
    %v483 = vmul.f32 %v482, 0.6931472
    %v484 = vmul.f32 -0.5, %v480
    %v485 = vadd.f32 %v484, 1.0
    %v486 = vmul.f32 %v485, %v480
    %v487 = vand.u32 2147483647, %v480
    %vm488 = vcmp.lt.f32.partialorder %v487, 0.0004427343
    %v489 = vsel %vm488, %v486, %v483
    %v490 = vadd.f32 %v474, %v489
    %v491 = vsel %vm475, %v476, %v490
    %492 = vst [vmem:[#allocation10] sm:$0xff] %v473
    %493 = vst [vmem:[#allocation11] sm:$0xff] %v491
    // Predicated region
    $region46: #{tpu_custom_call.1} parent=1 // pred_check
      _
    $region47: #{tpu_custom_call.1} parent=1 // pred_check_branch
      %495 = sbr.rel (0) target = $region49
    $region48: #{tpu_custom_call.1} parent=1 // pred_region
      %s497 = ssub.s32 128, 128
      %498 = vsyncadd [#allocation4], %s497
      %s500 = sshll.u32 [#allocation10], 4
      %s501 = int_to_ptr.vmem [resolvable:$true] %s500
      %503 = dma.vmem_to_hbm [thread:$0]  %s501, 128, %s7, [#allocation4]
    $region49: #{tpu_custom_call.1} parent=1 // pred_fallthru
      _
    // Predicated region
    $region50: #{tpu_custom_call.1} parent=1 // pred_check
      _
    $region51: #{tpu_custom_call.1} parent=1 // pred_check_branch
      %505 = sbr.rel (0) target = $region53
    $region52: #{tpu_custom_call.1} parent=1 // pred_region
      %s507 = ssub.s32 128, 128
      %508 = vsyncadd [#allocation12], %s507
      %s510 = sshll.u32 [#allocation11], 4
      %s511 = int_to_ptr.vmem [resolvable:$true] %s510
      %513 = dma.vmem_to_hbm [thread:$0]  %s511, 128, %s8, [#allocation12]
    $region53: #{tpu_custom_call.1} parent=1 // pred_fallthru
      _
    // Predicated region
    $region54: #{tpu_custom_call.1} parent=1 // pred_check
      _
    $region55: #{tpu_custom_call.1} parent=1 // pred_check_branch
      %515 = sbr.rel (0) target = $region57
    $region56: #{tpu_custom_call.1} parent=1 // pred_region
      %516 = dma.done [#allocation4], 128
    $region57: #{tpu_custom_call.1} parent=1 // pred_fallthru
      _
    // Predicated region
    $region58: #{tpu_custom_call.1} parent=1 // pred_check
      _
    $region59: #{tpu_custom_call.1} parent=1 // pred_check_branch
      %518 = sbr.rel (0) target = $region61
    $region60: #{tpu_custom_call.1} parent=1 // pred_region
      %519 = dma.done [#allocation12], 128
    $region61: #{tpu_custom_call.1} parent=1 // pred_fallthru
      _
    %520 = vsyncpa [#allocation3], 1
    %521 = vsyncpa [#allocation6], 1
    %522 = vsyncpa [#allocation9], 1
    %523 = vsyncpa [#allocation4], 1
    %524 = vsyncpa [#allocation12], 1

</llo_original>
